<compile_context>
chip_gen: v7x
topology: tpu7x:2x2x1
jax: 0.10.0
libtpu: 0.0.40
codegen_flags: <defaults>
</compile_context>

<pallas_src>
import functools

import jax
import jax.numpy as jnp
from jax import lax
from jax.experimental import pallas as pl
from jax.experimental.pallas import tpu as pltpu


def _aspp_fused_kernel(x_ref, w_ref, b_ref, o_ref, xcat_ref, *,
                       tap_offsets, cin, L):
    """Fused im2col path (small Cin).

    x_ref:    (1, Cin, flat_len) bf16 -- padded input, (H, W) flattened
    w_ref:    (Cout, T*Cin)      bf16 -- per-tap weights stacked along K
    b_ref:    (Cout, 1)          f32  -- biases pre-summed over the R branches
    o_ref:    (1, Cout, L)       f32  -- L = H*Wp, lane-dense; garbage columns
                                         are trimmed in the wrapper
    xcat_ref: (T*Cin, L)         bf16 -- VMEM im2col scratch
    """
    for t, off in enumerate(tap_offsets):          # static unroll over taps
        xcat_ref[pl.ds(t * cin, cin), :] = x_ref[0, :, pl.ds(off, L)]
    o_ref[0] = (jnp.dot(w_ref[...], xcat_ref[...],
                        preferred_element_type=jnp.float32)
                + b_ref[...])                      # lane-broadcast bias add


def _aspp_pertap_kernel(x_ref, w_ref, b_ref, o_ref, acc_ref, *,
                        tap_offsets, L):
    """Per-tap accumulation path (large Cin): T matmuls into a VMEM scratch.

    w_ref: (T, Cout, Cin) bf16; acc_ref: (Cout, L) f32 scratch.
    """
    acc_ref[...] = jnp.zeros_like(acc_ref)
    for t, off in enumerate(tap_offsets):          # static unroll over taps
        acc_ref[...] += jnp.dot(w_ref[t], x_ref[0, :, pl.ds(off, L)],
                                preferred_element_type=jnp.float32)
    o_ref[0] = acc_ref[...] + b_ref[...]


def build_aspp(weights_oihw, biases, rates):
    """One-time weight prep; returns a jitted NCHW -> NCHW forward closure."""
    rates = tuple(int(r) for r in rates)
    R, Cout, Cin, KH, KW = weights_oihw.shape
    assert (KH, KW) == (3, 3) and R == len(rates)
    max_r = max(rates)

    # Tap geometry in a fixed order; one (Cout, Cin) weight slab per tap,
    # each cast to bf16 exactly like the reference casts per-branch weights.
    tap_geo = tuple((rates[ri], ky, kx)
                    for ri in range(R) for ky in range(3) for kx in range(3))
    taps_w = [weights_oihw[ri, :, :, ky, kx]
              for ri in range(R) for ky in range(3) for kx in range(3)]
    T = len(tap_geo)

    fuse_taps = Cin < 128                          # per perf review: key on Cin
    if fuse_taps:
        w_arr = jnp.concatenate(taps_w, axis=1).astype(jnp.bfloat16)  # (Cout, T*Cin)
    else:
        w_arr = jnp.stack(taps_w, axis=0).astype(jnp.bfloat16)        # (T, Cout, Cin)
    b_sum = jnp.sum(biases.astype(jnp.float32), axis=0).reshape(Cout, 1)

    @jax.jit
    def forward(x_nchw):
        N, Cin_x, H, W = x_nchw.shape
        assert Cin_x == Cin
        Wp = W + 2 * max_r
        Hp = H + 2 * max_r
        L = H * Wp                      # output lane extent per image
        flat_len = (Hp + 1) * Wp        # one extra padded row keeps every
                                        # length-L tap slice in bounds

        tap_offsets = tuple(
            (max_r + (ky - 1) * r) * Wp + (max_r + (kx - 1) * r)
            for (r, ky, kx) in tap_geo)
        # VMEM OOB is unchecked on TPU -- assert the slices stay in bounds.
        assert max(tap_offsets) + L <= flat_len
        assert min(tap_offsets) >= 0

        # Pad once (bf16 cast fused into the same pass under jit), then
        # flatten (H, W) so taps become contiguous lane slices.
        x_pad = jnp.pad(x_nchw.astype(jnp.bfloat16),
                        ((0, 0), (0, 0), (max_r, max_r + 1), (max_r, max_r)))
        x_flat = x_pad.reshape(N, Cin, flat_len)

        if fuse_taps:
            kernel = functools.partial(_aspp_fused_kernel,
                                       tap_offsets=tap_offsets, cin=Cin, L=L)
            w_spec = pl.BlockSpec((Cout, T * Cin), lambda n: (0, 0))
            scratch = [pltpu.VMEM((T * Cin, L), jnp.bfloat16)]
        else:
            kernel = functools.partial(_aspp_pertap_kernel,
                                       tap_offsets=tap_offsets, L=L)
            w_spec = pl.BlockSpec((T, Cout, Cin), lambda n: (0, 0, 0))
            scratch = [pltpu.VMEM((Cout, L), jnp.float32)]

        out_flat = pl.pallas_call(
            kernel,
            out_shape=jax.ShapeDtypeStruct((N, Cout, L), jnp.float32),
            grid=(N,),
            in_specs=[
                pl.BlockSpec((1, Cin, flat_len), lambda n: (n, 0, 0)),
                w_spec,
                pl.BlockSpec((Cout, 1), lambda n: (0, 0)),
            ],
            out_specs=pl.BlockSpec((1, Cout, L), lambda n: (n, 0, 0)),
            scratch_shapes=scratch,
            compiler_params=pltpu.CompilerParams(
                dimension_semantics=("parallel",),
                vmem_limit_bytes=48 * 1024 * 1024),
        )(x_flat, w_arr, b_sum)

        # Drop the Wp - W garbage columns; output is already NCHW.
        return out_flat.reshape(N, Cout, H, Wp)[:, :, :, :W]

    return forward


def aspp_reference(x_nchw, weights_oihw, biases, rates):
    """Pure-JAX reference matching PyTorch Conv2d(dilation=r, padding=r),
    with the same bf16-input / f32-accumulate precision as the kernel."""
    x = x_nchw.astype(jnp.bfloat16)
    out = None
    for ri, r in enumerate(rates):
        y = lax.conv_general_dilated(
            x, weights_oihw[ri].astype(jnp.bfloat16),
            window_strides=(1, 1),
            padding=[(r, r), (r, r)],
            rhs_dilation=(r, r),
            dimension_numbers=("NCHW", "OIHW", "NCHW"),
            preferred_element_type=jnp.float32,
        ) + biases[ri].astype(jnp.float32)[None, :, None, None]
        out = y if out is None else out + y
    return out


if __name__ == "__main__":
    # Small shapes consistent with the module.
    N, Cin, H, W = 2, 4, 16, 16
    Cout = 4
    rates = (1, 2, 4)
    R = len(rates)

    key = jax.random.PRNGKey(0)
    k_x, k_w, k_b = jax.random.split(key, 3)

    x = jax.random.normal(k_x, (N, Cin, H, W), dtype=jnp.float32)
    # Module init is std=0.01 weights / zero bias; use nonzero biases here so
    # the bias path is actually exercised.
    weights = 0.01 * jax.random.normal(k_w, (R, Cout, Cin, 3, 3),
                                       dtype=jnp.float32)
    biases = 0.1 * jax.random.normal(k_b, (R, Cout), dtype=jnp.float32)

    forward = build_aspp(weights, biases, rates)
    out = jax.block_until_ready(forward(x))

    ref = aspp_reference(x, weights, biases, rates)
    assert out.shape == (N, Cout, H, W)
    max_err = float(jnp.max(jnp.abs(out - ref)))
    assert jnp.allclose(out, ref, atol=1e-4, rtol=1e-4), max_err

    print("KERNEL_OK")
</pallas_src>

<mosaic_0001>
module attributes {stable_mosaic.version = 11 : i64} {
  func.func @_aspp_fused_kernel(%arg0: i32, %arg1: memref<1x4x600xbf16, #tpu.memory_space<vmem>>, %arg2: memref<4x108xbf16, #tpu.memory_space<vmem>>, %arg3: memref<4x1xf32, #tpu.memory_space<vmem>>, %arg4: memref<1x4x384xf32, #tpu.memory_space<vmem>>, %arg5: memref<108x384xbf16, #tpu.memory_space<vmem>>) attributes {dimension_semantics = [#tpu.dimension_semantics<parallel>], iteration_bounds = array<i64: 2>, scalar_prefetch = 0 : i64, scratch_operands = 1 : i64, tpu.core_type = #tpu.core_type<tc>, window_params = [{transform_indices = @transform_0, window_bounds = array<i64: 1, 4, 600>}, {pipeline_mode = #tpu.pipeline_mode<synchronous>, transform_indices = @transform_1, window_bounds = array<i64: 4, 108>}, {pipeline_mode = #tpu.pipeline_mode<synchronous>, transform_indices = @transform_2, window_bounds = array<i64: 4, 1>}, {transform_indices = @transform_3, window_bounds = array<i64: 1, 4, 384>}]} {
    %c0 = arith.constant 0 : index
    %c0_0 = arith.constant 0 : index
    %c75 = arith.constant 75 : index
    %0 = vector.load %arg1[%c0, %c0_0, %c75] : memref<1x4x600xbf16, #tpu.memory_space<vmem>>, vector<1x4x384xbf16>
    %1 = vector.shape_cast %0 : vector<1x4x384xbf16> to vector<4x384xbf16>
    %c0_1 = arith.constant 0 : index
    %c0_2 = arith.constant 0 : index
    %2 = vector.load %arg5[%c0_1, %c0_2] : memref<108x384xbf16, #tpu.memory_space<vmem>>, vector<4x384xbf16>
    tpu.vector_store %arg5[%c0_1, %c0_2], %1 {strides = array<i32>} : memref<108x384xbf16, #tpu.memory_space<vmem>>, vector<4x384xbf16>,
    %c0_3 = arith.constant 0 : index
    %c0_4 = arith.constant 0 : index
    %c76 = arith.constant 76 : index
    %3 = vector.load %arg1[%c0_3, %c0_4, %c76] : memref<1x4x600xbf16, #tpu.memory_space<vmem>>, vector<1x4x384xbf16>
    %4 = vector.shape_cast %3 : vector<1x4x384xbf16> to vector<4x384xbf16>
    %c4 = arith.constant 4 : index
    %c0_5 = arith.constant 0 : index
    %5 = vector.load %arg5[%c4, %c0_5] : memref<108x384xbf16, #tpu.memory_space<vmem>>, vector<4x384xbf16>
    tpu.vector_store %arg5[%c4, %c0_5], %4 {strides = array<i32>} : memref<108x384xbf16, #tpu.memory_space<vmem>>, vector<4x384xbf16>,
    %c0_6 = arith.constant 0 : index
    %c0_7 = arith.constant 0 : index
    %c77 = arith.constant 77 : index
    %6 = vector.load %arg1[%c0_6, %c0_7, %c77] : memref<1x4x600xbf16, #tpu.memory_space<vmem>>, vector<1x4x384xbf16>
    %7 = vector.shape_cast %6 : vector<1x4x384xbf16> to vector<4x384xbf16>
    %c8 = arith.constant 8 : index
    %c0_8 = arith.constant 0 : index
    %8 = vector.load %arg5[%c8, %c0_8] : memref<108x384xbf16, #tpu.memory_space<vmem>>, vector<4x384xbf16>
    tpu.vector_store %arg5[%c8, %c0_8], %7 {strides = array<i32>} : memref<108x384xbf16, #tpu.memory_space<vmem>>, vector<4x384xbf16>,
    %c0_9 = arith.constant 0 : index
    %c0_10 = arith.constant 0 : index
    %c99 = arith.constant 99 : index
    %9 = vector.load %arg1[%c0_9, %c0_10, %c99] : memref<1x4x600xbf16, #tpu.memory_space<vmem>>, vector<1x4x384xbf16>
    %10 = vector.shape_cast %9 : vector<1x4x384xbf16> to vector<4x384xbf16>
    %c12 = arith.constant 12 : index
    %c0_11 = arith.constant 0 : index
    %11 = vector.load %arg5[%c12, %c0_11] : memref<108x384xbf16, #tpu.memory_space<vmem>>, vector<4x384xbf16>
    tpu.vector_store %arg5[%c12, %c0_11], %10 {strides = array<i32>} : memref<108x384xbf16, #tpu.memory_space<vmem>>, vector<4x384xbf16>,
    %c0_12 = arith.constant 0 : index
    %c0_13 = arith.constant 0 : index
    %c100 = arith.constant 100 : index
    %12 = vector.load %arg1[%c0_12, %c0_13, %c100] : memref<1x4x600xbf16, #tpu.memory_space<vmem>>, vector<1x4x384xbf16>
    %13 = vector.shape_cast %12 : vector<1x4x384xbf16> to vector<4x384xbf16>
    %c16 = arith.constant 16 : index
    %c0_14 = arith.constant 0 : index
    %14 = vector.load %arg5[%c16, %c0_14] : memref<108x384xbf16, #tpu.memory_space<vmem>>, vector<4x384xbf16>
    tpu.vector_store %arg5[%c16, %c0_14], %13 {strides = array<i32>} : memref<108x384xbf16, #tpu.memory_space<vmem>>, vector<4x384xbf16>,
    %c0_15 = arith.constant 0 : index
    %c0_16 = arith.constant 0 : index
    %c101 = arith.constant 101 : index
    %15 = vector.load %arg1[%c0_15, %c0_16, %c101] : memref<1x4x600xbf16, #tpu.memory_space<vmem>>, vector<1x4x384xbf16>
    %16 = vector.shape_cast %15 : vector<1x4x384xbf16> to vector<4x384xbf16>
    %c20 = arith.constant 20 : index
    %c0_17 = arith.constant 0 : index
    %17 = vector.load %arg5[%c20, %c0_17] : memref<108x384xbf16, #tpu.memory_space<vmem>>, vector<4x384xbf16>
    tpu.vector_store %arg5[%c20, %c0_17], %16 {strides = array<i32>} : memref<108x384xbf16, #tpu.memory_space<vmem>>, vector<4x384xbf16>,
    %c0_18 = arith.constant 0 : index
    %c0_19 = arith.constant 0 : index
    %c123 = arith.constant 123 : index
    %18 = vector.load %arg1[%c0_18, %c0_19, %c123] : memref<1x4x600xbf16, #tpu.memory_space<vmem>>, vector<1x4x384xbf16>
    %19 = vector.shape_cast %18 : vector<1x4x384xbf16> to vector<4x384xbf16>
    %c24 = arith.constant 24 : index
    %c0_20 = arith.constant 0 : index
    %20 = vector.load %arg5[%c24, %c0_20] : memref<108x384xbf16, #tpu.memory_space<vmem>>, vector<4x384xbf16>
    tpu.vector_store %arg5[%c24, %c0_20], %19 {strides = array<i32>} : memref<108x384xbf16, #tpu.memory_space<vmem>>, vector<4x384xbf16>,
    %c0_21 = arith.constant 0 : index
    %c0_22 = arith.constant 0 : index
    %c124 = arith.constant 124 : index
    %21 = vector.load %arg1[%c0_21, %c0_22, %c124] : memref<1x4x600xbf16, #tpu.memory_space<vmem>>, vector<1x4x384xbf16>
    %22 = vector.shape_cast %21 : vector<1x4x384xbf16> to vector<4x384xbf16>
    %c28 = arith.constant 28 : index
    %c0_23 = arith.constant 0 : index
    %23 = vector.load %arg5[%c28, %c0_23] : memref<108x384xbf16, #tpu.memory_space<vmem>>, vector<4x384xbf16>
    tpu.vector_store %arg5[%c28, %c0_23], %22 {strides = array<i32>} : memref<108x384xbf16, #tpu.memory_space<vmem>>, vector<4x384xbf16>,
    %c0_24 = arith.constant 0 : index
    %c0_25 = arith.constant 0 : index
    %c125 = arith.constant 125 : index
    %24 = vector.load %arg1[%c0_24, %c0_25, %c125] : memref<1x4x600xbf16, #tpu.memory_space<vmem>>, vector<1x4x384xbf16>
    %25 = vector.shape_cast %24 : vector<1x4x384xbf16> to vector<4x384xbf16>
    %c32 = arith.constant 32 : index
    %c0_26 = arith.constant 0 : index
    %26 = vector.load %arg5[%c32, %c0_26] : memref<108x384xbf16, #tpu.memory_space<vmem>>, vector<4x384xbf16>
    tpu.vector_store %arg5[%c32, %c0_26], %25 {strides = array<i32>} : memref<108x384xbf16, #tpu.memory_space<vmem>>, vector<4x384xbf16>,
    %c0_27 = arith.constant 0 : index
    %c0_28 = arith.constant 0 : index
    %c50 = arith.constant 50 : index
    %27 = vector.load %arg1[%c0_27, %c0_28, %c50] : memref<1x4x600xbf16, #tpu.memory_space<vmem>>, vector<1x4x384xbf16>
    %28 = vector.shape_cast %27 : vector<1x4x384xbf16> to vector<4x384xbf16>
    %c36 = arith.constant 36 : index
    %c0_29 = arith.constant 0 : index
    %29 = vector.load %arg5[%c36, %c0_29] : memref<108x384xbf16, #tpu.memory_space<vmem>>, vector<4x384xbf16>
    tpu.vector_store %arg5[%c36, %c0_29], %28 {strides = array<i32>} : memref<108x384xbf16, #tpu.memory_space<vmem>>, vector<4x384xbf16>,
    %c0_30 = arith.constant 0 : index
    %c0_31 = arith.constant 0 : index
    %c52 = arith.constant 52 : index
    %30 = vector.load %arg1[%c0_30, %c0_31, %c52] : memref<1x4x600xbf16, #tpu.memory_space<vmem>>, vector<1x4x384xbf16>
    %31 = vector.shape_cast %30 : vector<1x4x384xbf16> to vector<4x384xbf16>
    %c40 = arith.constant 40 : index
    %c0_32 = arith.constant 0 : index
    %32 = vector.load %arg5[%c40, %c0_32] : memref<108x384xbf16, #tpu.memory_space<vmem>>, vector<4x384xbf16>
    tpu.vector_store %arg5[%c40, %c0_32], %31 {strides = array<i32>} : memref<108x384xbf16, #tpu.memory_space<vmem>>, vector<4x384xbf16>,
    %c0_33 = arith.constant 0 : index
    %c0_34 = arith.constant 0 : index
    %c54 = arith.constant 54 : index
    %33 = vector.load %arg1[%c0_33, %c0_34, %c54] : memref<1x4x600xbf16, #tpu.memory_space<vmem>>, vector<1x4x384xbf16>
    %34 = vector.shape_cast %33 : vector<1x4x384xbf16> to vector<4x384xbf16>
    %c44 = arith.constant 44 : index
    %c0_35 = arith.constant 0 : index
    %35 = vector.load %arg5[%c44, %c0_35] : memref<108x384xbf16, #tpu.memory_space<vmem>>, vector<4x384xbf16>
    tpu.vector_store %arg5[%c44, %c0_35], %34 {strides = array<i32>} : memref<108x384xbf16, #tpu.memory_space<vmem>>, vector<4x384xbf16>,
    %c0_36 = arith.constant 0 : index
    %c0_37 = arith.constant 0 : index
    %c98 = arith.constant 98 : index
    %36 = vector.load %arg1[%c0_36, %c0_37, %c98] : memref<1x4x600xbf16, #tpu.memory_space<vmem>>, vector<1x4x384xbf16>
    %37 = vector.shape_cast %36 : vector<1x4x384xbf16> to vector<4x384xbf16>
    %c48 = arith.constant 48 : index
    %c0_38 = arith.constant 0 : index
    %38 = vector.load %arg5[%c48, %c0_38] : memref<108x384xbf16, #tpu.memory_space<vmem>>, vector<4x384xbf16>
    tpu.vector_store %arg5[%c48, %c0_38], %37 {strides = array<i32>} : memref<108x384xbf16, #tpu.memory_space<vmem>>, vector<4x384xbf16>,
    %c0_39 = arith.constant 0 : index
    %c0_40 = arith.constant 0 : index
    %c100_41 = arith.constant 100 : index
    %39 = vector.load %arg1[%c0_39, %c0_40, %c100_41] : memref<1x4x600xbf16, #tpu.memory_space<vmem>>, vector<1x4x384xbf16>
    %40 = vector.shape_cast %39 : vector<1x4x384xbf16> to vector<4x384xbf16>
    %c52_42 = arith.constant 52 : index
    %c0_43 = arith.constant 0 : index
    %41 = vector.load %arg5[%c52_42, %c0_43] : memref<108x384xbf16, #tpu.memory_space<vmem>>, vector<4x384xbf16>
    tpu.vector_store %arg5[%c52_42, %c0_43], %40 {strides = array<i32>} : memref<108x384xbf16, #tpu.memory_space<vmem>>, vector<4x384xbf16>,
    %c0_44 = arith.constant 0 : index
    %c0_45 = arith.constant 0 : index
    %c102 = arith.constant 102 : index
    %42 = vector.load %arg1[%c0_44, %c0_45, %c102] : memref<1x4x600xbf16, #tpu.memory_space<vmem>>, vector<1x4x384xbf16>
    %43 = vector.shape_cast %42 : vector<1x4x384xbf16> to vector<4x384xbf16>
    %c56 = arith.constant 56 : index
    %c0_46 = arith.constant 0 : index
    %44 = vector.load %arg5[%c56, %c0_46] : memref<108x384xbf16, #tpu.memory_space<vmem>>, vector<4x384xbf16>
    tpu.vector_store %arg5[%c56, %c0_46], %43 {strides = array<i32>} : memref<108x384xbf16, #tpu.memory_space<vmem>>, vector<4x384xbf16>,
    %c0_47 = arith.constant 0 : index
    %c0_48 = arith.constant 0 : index
    %c146 = arith.constant 146 : index
    %45 = vector.load %arg1[%c0_47, %c0_48, %c146] : memref<1x4x600xbf16, #tpu.memory_space<vmem>>, vector<1x4x384xbf16>
    %46 = vector.shape_cast %45 : vector<1x4x384xbf16> to vector<4x384xbf16>
    %c60 = arith.constant 60 : index
    %c0_49 = arith.constant 0 : index
    %47 = vector.load %arg5[%c60, %c0_49] : memref<108x384xbf16, #tpu.memory_space<vmem>>, vector<4x384xbf16>
    tpu.vector_store %arg5[%c60, %c0_49], %46 {strides = array<i32>} : memref<108x384xbf16, #tpu.memory_space<vmem>>, vector<4x384xbf16>,
    %c0_50 = arith.constant 0 : index
    %c0_51 = arith.constant 0 : index
    %c148 = arith.constant 148 : index
    %48 = vector.load %arg1[%c0_50, %c0_51, %c148] : memref<1x4x600xbf16, #tpu.memory_space<vmem>>, vector<1x4x384xbf16>
    %49 = vector.shape_cast %48 : vector<1x4x384xbf16> to vector<4x384xbf16>
    %c64 = arith.constant 64 : index
    %c0_52 = arith.constant 0 : index
    %50 = vector.load %arg5[%c64, %c0_52] : memref<108x384xbf16, #tpu.memory_space<vmem>>, vector<4x384xbf16>
    tpu.vector_store %arg5[%c64, %c0_52], %49 {strides = array<i32>} : memref<108x384xbf16, #tpu.memory_space<vmem>>, vector<4x384xbf16>,
    %c0_53 = arith.constant 0 : index
    %c0_54 = arith.constant 0 : index
    %c150 = arith.constant 150 : index
    %51 = vector.load %arg1[%c0_53, %c0_54, %c150] : memref<1x4x600xbf16, #tpu.memory_space<vmem>>, vector<1x4x384xbf16>
    %52 = vector.shape_cast %51 : vector<1x4x384xbf16> to vector<4x384xbf16>
    %c68 = arith.constant 68 : index
    %c0_55 = arith.constant 0 : index
    %53 = vector.load %arg5[%c68, %c0_55] : memref<108x384xbf16, #tpu.memory_space<vmem>>, vector<4x384xbf16>
    tpu.vector_store %arg5[%c68, %c0_55], %52 {strides = array<i32>} : memref<108x384xbf16, #tpu.memory_space<vmem>>, vector<4x384xbf16>,
    %c0_56 = arith.constant 0 : index
    %c0_57 = arith.constant 0 : index
    %c0_58 = arith.constant 0 : index
    %54 = vector.load %arg1[%c0_56, %c0_57, %c0_58] : memref<1x4x600xbf16, #tpu.memory_space<vmem>>, vector<1x4x384xbf16>
    %55 = vector.shape_cast %54 : vector<1x4x384xbf16> to vector<4x384xbf16>
    %c72 = arith.constant 72 : index
    %c0_59 = arith.constant 0 : index
    %56 = vector.load %arg5[%c72, %c0_59] : memref<108x384xbf16, #tpu.memory_space<vmem>>, vector<4x384xbf16>
    tpu.vector_store %arg5[%c72, %c0_59], %55 {strides = array<i32>} : memref<108x384xbf16, #tpu.memory_space<vmem>>, vector<4x384xbf16>,
    %c0_60 = arith.constant 0 : index
    %c0_61 = arith.constant 0 : index
    %c4_62 = arith.constant 4 : index
    %57 = vector.load %arg1[%c0_60, %c0_61, %c4_62] : memref<1x4x600xbf16, #tpu.memory_space<vmem>>, vector<1x4x384xbf16>
    %58 = vector.shape_cast %57 : vector<1x4x384xbf16> to vector<4x384xbf16>
    %c76_63 = arith.constant 76 : index
    %c0_64 = arith.constant 0 : index
    %59 = vector.load %arg5[%c76_63, %c0_64] : memref<108x384xbf16, #tpu.memory_space<vmem>>, vector<4x384xbf16>
    tpu.vector_store %arg5[%c76_63, %c0_64], %58 {strides = array<i32>} : memref<108x384xbf16, #tpu.memory_space<vmem>>, vector<4x384xbf16>,
    %c0_65 = arith.constant 0 : index
    %c0_66 = arith.constant 0 : index
    %c8_67 = arith.constant 8 : index
    %60 = vector.load %arg1[%c0_65, %c0_66, %c8_67] : memref<1x4x600xbf16, #tpu.memory_space<vmem>>, vector<1x4x384xbf16>
    %61 = vector.shape_cast %60 : vector<1x4x384xbf16> to vector<4x384xbf16>
    %c80 = arith.constant 80 : index
    %c0_68 = arith.constant 0 : index
    %62 = vector.load %arg5[%c80, %c0_68] : memref<108x384xbf16, #tpu.memory_space<vmem>>, vector<4x384xbf16>
    tpu.vector_store %arg5[%c80, %c0_68], %61 {strides = array<i32>} : memref<108x384xbf16, #tpu.memory_space<vmem>>, vector<4x384xbf16>,
    %c0_69 = arith.constant 0 : index
    %c0_70 = arith.constant 0 : index
    %c96 = arith.constant 96 : index
    %63 = vector.load %arg1[%c0_69, %c0_70, %c96] : memref<1x4x600xbf16, #tpu.memory_space<vmem>>, vector<1x4x384xbf16>
    %64 = vector.shape_cast %63 : vector<1x4x384xbf16> to vector<4x384xbf16>
    %c84 = arith.constant 84 : index
    %c0_71 = arith.constant 0 : index
    %65 = vector.load %arg5[%c84, %c0_71] : memref<108x384xbf16, #tpu.memory_space<vmem>>, vector<4x384xbf16>
    tpu.vector_store %arg5[%c84, %c0_71], %64 {strides = array<i32>} : memref<108x384xbf16, #tpu.memory_space<vmem>>, vector<4x384xbf16>,
    %c0_72 = arith.constant 0 : index
    %c0_73 = arith.constant 0 : index
    %c100_74 = arith.constant 100 : index
    %66 = vector.load %arg1[%c0_72, %c0_73, %c100_74] : memref<1x4x600xbf16, #tpu.memory_space<vmem>>, vector<1x4x384xbf16>
    %67 = vector.shape_cast %66 : vector<1x4x384xbf16> to vector<4x384xbf16>
    %c88 = arith.constant 88 : index
    %c0_75 = arith.constant 0 : index
    %68 = vector.load %arg5[%c88, %c0_75] : memref<108x384xbf16, #tpu.memory_space<vmem>>, vector<4x384xbf16>
    tpu.vector_store %arg5[%c88, %c0_75], %67 {strides = array<i32>} : memref<108x384xbf16, #tpu.memory_space<vmem>>, vector<4x384xbf16>,
    %c0_76 = arith.constant 0 : index
    %c0_77 = arith.constant 0 : index
    %c104 = arith.constant 104 : index
    %69 = vector.load %arg1[%c0_76, %c0_77, %c104] : memref<1x4x600xbf16, #tpu.memory_space<vmem>>, vector<1x4x384xbf16>
    %70 = vector.shape_cast %69 : vector<1x4x384xbf16> to vector<4x384xbf16>
    %c92 = arith.constant 92 : index
    %c0_78 = arith.constant 0 : index
    %71 = vector.load %arg5[%c92, %c0_78] : memref<108x384xbf16, #tpu.memory_space<vmem>>, vector<4x384xbf16>
    tpu.vector_store %arg5[%c92, %c0_78], %70 {strides = array<i32>} : memref<108x384xbf16, #tpu.memory_space<vmem>>, vector<4x384xbf16>,
    %c0_79 = arith.constant 0 : index
    %c0_80 = arith.constant 0 : index
    %c192 = arith.constant 192 : index
    %72 = vector.load %arg1[%c0_79, %c0_80, %c192] : memref<1x4x600xbf16, #tpu.memory_space<vmem>>, vector<1x4x384xbf16>
    %73 = vector.shape_cast %72 : vector<1x4x384xbf16> to vector<4x384xbf16>
    %c96_81 = arith.constant 96 : index
    %c0_82 = arith.constant 0 : index
    %74 = vector.load %arg5[%c96_81, %c0_82] : memref<108x384xbf16, #tpu.memory_space<vmem>>, vector<4x384xbf16>
    tpu.vector_store %arg5[%c96_81, %c0_82], %73 {strides = array<i32>} : memref<108x384xbf16, #tpu.memory_space<vmem>>, vector<4x384xbf16>,
    %c0_83 = arith.constant 0 : index
    %c0_84 = arith.constant 0 : index
    %c196 = arith.constant 196 : index
    %75 = vector.load %arg1[%c0_83, %c0_84, %c196] : memref<1x4x600xbf16, #tpu.memory_space<vmem>>, vector<1x4x384xbf16>
    %76 = vector.shape_cast %75 : vector<1x4x384xbf16> to vector<4x384xbf16>
    %c100_85 = arith.constant 100 : index
    %c0_86 = arith.constant 0 : index
    %77 = vector.load %arg5[%c100_85, %c0_86] : memref<108x384xbf16, #tpu.memory_space<vmem>>, vector<4x384xbf16>
    tpu.vector_store %arg5[%c100_85, %c0_86], %76 {strides = array<i32>} : memref<108x384xbf16, #tpu.memory_space<vmem>>, vector<4x384xbf16>,
    %c0_87 = arith.constant 0 : index
    %c0_88 = arith.constant 0 : index
    %c200 = arith.constant 200 : index
    %78 = vector.load %arg1[%c0_87, %c0_88, %c200] : memref<1x4x600xbf16, #tpu.memory_space<vmem>>, vector<1x4x384xbf16>
    %79 = vector.shape_cast %78 : vector<1x4x384xbf16> to vector<4x384xbf16>
    %c104_89 = arith.constant 104 : index
    %c0_90 = arith.constant 0 : index
    %80 = vector.load %arg5[%c104_89, %c0_90] : memref<108x384xbf16, #tpu.memory_space<vmem>>, vector<4x384xbf16>
    tpu.vector_store %arg5[%c104_89, %c0_90], %79 {strides = array<i32>} : memref<108x384xbf16, #tpu.memory_space<vmem>>, vector<4x384xbf16>,
    %c0_91 = arith.constant 0 : index
    %c0_92 = arith.constant 0 : index
    %81 = vector.load %arg2[%c0_91, %c0_92] : memref<4x108xbf16, #tpu.memory_space<vmem>>, vector<4x108xbf16>
    %c0_93 = arith.constant 0 : index
    %c0_94 = arith.constant 0 : index
    %82 = vector.load %arg5[%c0_93, %c0_94] : memref<108x384xbf16, #tpu.memory_space<vmem>>, vector<108x384xbf16>
    %cst = arith.constant dense<0.000000e+00> : vector<4x384xf32>
    %83 = tpu.matmul %81, %82, %cst {dimension_numbers = #tpu.dot_dimension_numbers<[1], [0], [0], [1], [0, 0, 1, 1], [], []>} : vector<4x108xbf16>, vector<108x384xbf16>, vector<4x384xf32> -> vector<4x384xf32>
    %c0_95 = arith.constant 0 : index
    %c0_96 = arith.constant 0 : index
    %84 = vector.load %arg3[%c0_95, %c0_96] : memref<4x1xf32, #tpu.memory_space<vmem>>, vector<4x1xf32>
    %85 = vector.broadcast %84 : vector<4x1xf32> to vector<4x384xf32>
    %86 = arith.addf %83, %85 : vector<4x384xf32>
    %c0_97 = arith.constant 0 : index
    %c0_98 = arith.constant 0 : index
    %c0_99 = arith.constant 0 : index
    %87 = vector.load %arg4[%c0_97, %c0_98, %c0_99] : memref<1x4x384xf32, #tpu.memory_space<vmem>>, vector<1x4x384xf32>
    %88 = vector.shape_cast %87 : vector<1x4x384xf32> to vector<4x384xf32>
    %89 = vector.shape_cast %86 : vector<4x384xf32> to vector<1x4x384xf32>
    tpu.vector_store %arg4[%c0_97, %c0_98, %c0_99], %89 {strides = array<i32>} : memref<1x4x384xf32, #tpu.memory_space<vmem>>, vector<1x4x384xf32>,
    return
  }
  func.func @transform_0(%arg0: i32) -> (i32, i32, i32) {
    %c0_i32 = arith.constant 0 : i32
    %c0_i32_0 = arith.constant 0 : i32
    %c0_i32_1 = arith.constant 0 : i32
    return %arg0, %c0_i32, %c0_i32_0 : i32, i32, i32
  }
  func.func @transform_1(%arg0: i32) -> (i32, i32) {
    %c0_i32 = arith.constant 0 : i32
    %c0_i32_0 = arith.constant 0 : i32
    %c0_i32_1 = arith.constant 0 : i32
    return %c0_i32, %c0_i32_0 : i32, i32
  }
  func.func @transform_2(%arg0: i32) -> (i32, i32) {
    %c0_i32 = arith.constant 0 : i32
    %c0_i32_0 = arith.constant 0 : i32
    %c0_i32_1 = arith.constant 0 : i32
    return %c0_i32, %c0_i32_0 : i32, i32
  }
  func.func @transform_3(%arg0: i32) -> (i32, i32, i32) {
    %c0_i32 = arith.constant 0 : i32
    %c0_i32_0 = arith.constant 0 : i32
    %c0_i32_1 = arith.constant 0 : i32
    return %arg0, %c0_i32, %c0_i32_0 : i32, i32, i32
  }
}

</mosaic_0001>

<llo_original>
// kernel: forward.1
$region0: #{forward.1}
  #allocation0 [shape = 'u32[]', space=smem, size = 0x4, offset = 0x4, fixed_abs, tag = 'smem constant byte address 0x4 - core index']
  #allocation1 [shape = 'u32[144,128]{1,0:T(1,128)}', space=vmem, size = 0x12000, scoped, tag = 'internal scratch']
  #allocation2 [shape = 'bf16[108,384]{1,0:T(8,128)(2,1)}', space=vmem, size = 0x15000, scoped, tag = 'scratch operand']
  %s0 = inlined_call_operand.vmem [shape: bf16[2,4,600], index: 0, kind: input, shape index: {}]
  %s1 = inlined_call_operand.vmem [shape: bf16[4,108], index: 1, kind: input, shape index: {}]
  %s2 = inlined_call_operand.vmem [shape: f32[4,1], index: 2, kind: input, shape index: {}]
  %s3 = inlined_call_operand.vmem [shape: f32[2,4,384], index: 3, kind: output, shape index: {}]
  %s4 = sld [smem:[#allocation0]]
  $region45: #{forward.1} parent=0
    _
  %s6 = ssub.s32 1, %s4
  %s7 = scalar_select 0, %s6, %s4
  loop: start=0, step=1, limit=4
  $region2: #{forward.1} parent=0 // loop_pre_header
    _
  $region3: #{forward.1} parent=0 // loop_header
    %s9 = sphi 0, %s13
    %p10 = scmp.ge.s32.totalorder %s9, 4
    %s19 = sphi 0, %s21
    %s22 = sphi 0, %s19
    %s23 = sphi 0, %s22
    %s39 = sphi 0, %s23
    %s43 = sphi 0, %s43
    %s45 = sphi 0, %s43
    %s46 = sphi 0, %s45
    %s60 = sphi 0, %s46
    %s64 = sphi 0, %s64
    %s66 = sphi 0, %s64
    %s67 = sphi 0, %s66
    %s81 = sphi 0, %s67
    %s87 = sphi 0, %s89
    %s90 = sphi 0, %s87
    %s91 = sphi 0, %s90
    %s107 = sphi 0, %s91
  $region4: #{forward.1} parent=0 // loop_header_branch
    %12 = sbr.rel (%p10) target = $region8
  $region5: #{forward.1} parent=0 // loop_body
    %s14 = ssub.s32 %s9, 1
    %s15 = ssub.s32 %s9, 2
    %s16 = sadd.s32 %s9, 1
    %s17 = ssub.s32 %s9, %s16
    %p18 = scmp.eq.s32.totalorder %s17, 0
    %s20 = sadd.s32 %s19, 1
    %s21 = scalar_select %p18, %s19, %s20
    %p24 = pneg %p18
    %p25 = scmp.eq.s32.totalorder %s9, 1
    %p26 = por %p24, %p25
    %p27 = scmp.ne.s32.totalorder %s19, %s22
    %p28 = scmp.eq.s32.totalorder %s9, 0
    %p29 = por %p27, %p28
    %p30 = scmp.ne.s32.totalorder %s19, %s22
    %p31 = scmp.eq.s32.totalorder %s14, 1
    %p32 = por %p30, %p31
    %p33 = scmp.ne.s32.totalorder %s22, %s23
    %p34 = scmp.eq.s32.totalorder %s14, 0
    %p35 = por %p33, %p34
    %p36 = scmp.ne.s32.totalorder %s22, %s23
    %p37 = scmp.eq.s32.totalorder %s15, 1
    %p38 = por %p36, %p37
    %p40 = scmp.ne.s32.totalorder %s23, %s39
    %p41 = scmp.eq.s32.totalorder %s15, 0
    %p42 = por %p40, %p41
    %s44 = sadd.s32 %s43, 1
    %p47 = scmp.eq.s32.totalorder %s9, 1
    %p48 = scmp.ne.s32.totalorder %s43, %s45
    %p49 = scmp.eq.s32.totalorder %s9, 0
    %p50 = por %p48, %p49
    %p51 = scmp.ne.s32.totalorder %s43, %s45
    %p52 = scmp.eq.s32.totalorder %s14, 1
    %p53 = por %p51, %p52
    %p54 = scmp.ne.s32.totalorder %s45, %s46
    %p55 = scmp.eq.s32.totalorder %s14, 0
    %p56 = por %p54, %p55
    %p57 = scmp.ne.s32.totalorder %s45, %s46
    %p58 = scmp.eq.s32.totalorder %s15, 1
    %p59 = por %p57, %p58
    %p61 = scmp.ne.s32.totalorder %s46, %s60
    %p62 = scmp.eq.s32.totalorder %s15, 0
    %p63 = por %p61, %p62
    %s65 = sadd.s32 %s64, 1
    %p68 = scmp.eq.s32.totalorder %s9, 1
    %p69 = scmp.ne.s32.totalorder %s64, %s66
    %p70 = scmp.eq.s32.totalorder %s9, 0
    %p71 = por %p69, %p70
    %p72 = scmp.ne.s32.totalorder %s64, %s66
    %p73 = scmp.eq.s32.totalorder %s14, 1
    %p74 = por %p72, %p73
    %p75 = scmp.ne.s32.totalorder %s66, %s67
    %p76 = scmp.eq.s32.totalorder %s14, 0
    %p77 = por %p75, %p76
    %p78 = scmp.ne.s32.totalorder %s66, %s67
    %p79 = scmp.eq.s32.totalorder %s15, 1
    %p80 = por %p78, %p79
    %p82 = scmp.ne.s32.totalorder %s67, %s81
    %p83 = scmp.eq.s32.totalorder %s15, 0
    %p84 = por %p82, %p83
    %s85 = ssub.s32 %s9, %s16
    %p86 = scmp.eq.s32.totalorder %s85, 0
    %s88 = sadd.s32 %s87, 1
    %s89 = scalar_select %p86, %s87, %s88
    %p92 = pneg %p86
    %p93 = scmp.eq.s32.totalorder %s9, 1
    %p94 = por %p92, %p93
    %p95 = scmp.ne.s32.totalorder %s87, %s90
    %p96 = scmp.eq.s32.totalorder %s9, 0
    %p97 = por %p95, %p96
    %p98 = scmp.ne.s32.totalorder %s87, %s90
    %p99 = scmp.eq.s32.totalorder %s14, 1
    %p100 = por %p98, %p99
    %p101 = scmp.ne.s32.totalorder %s90, %s91
    %p102 = scmp.eq.s32.totalorder %s14, 0
    %p103 = por %p101, %p102
    %p104 = scmp.ne.s32.totalorder %s90, %s91
    %p105 = scmp.eq.s32.totalorder %s15, 1
    %p106 = por %p104, %p105
    %p108 = scmp.ne.s32.totalorder %s91, %s107
    %p109 = scmp.eq.s32.totalorder %s15, 0
    %p110 = por %p108, %p109
    %p111 = scmp.le.s32.totalorder 1, %s9
    %p112 = scmp.lt.s32.totalorder %s9, 3
    %p113 = pnand %p111, %p112
    %p114 = pneg %p113
    // Predicated region
    $region9: #{forward.1} parent=5 // pred_check
      _
    $region10: #{forward.1} parent=5 // pred_check_branch
      %116 = sbr.rel (%p113) target = $region12
    $region11: #{forward.1} parent=5 // pred_region
      %s117 = ssub.s32 %s9, 1
      // Predicated region
      $region13: #{forward.1} parent=11 // pred_check
        %p118 = pneg %p56
      $region14: #{forward.1} parent=11 // pred_check_branch
        %120 = sbr.rel (%p118) target = $region16
      $region15: #{forward.1} parent=11 // pred_region
        _
      $region16: #{forward.1} parent=11 // pred_fallthru
        _
      // Predicated region
      $region17: #{forward.1} parent=11 // pred_check
        %p121 = pneg %p77
      $region18: #{forward.1} parent=11 // pred_check_branch
        %123 = sbr.rel (%p121) target = $region20
      $region19: #{forward.1} parent=11 // pred_region
        _
      $region20: #{forward.1} parent=11 // pred_fallthru
        _
    $region12: #{forward.1} parent=5 // pred_fallthru
      _
    %p124 = scmp.lt.s32.totalorder %s9, 2
    // Predicated region
    $region21: #{forward.1} parent=5 // pred_check
      %p125 = pneg %p124
    $region22: #{forward.1} parent=5 // pred_check_branch
      %127 = sbr.rel (%p125) target = $region24
    $region23: #{forward.1} parent=5 // pred_region
      // Predicated region
      $region25: #{forward.1} parent=23 // pred_check
        %p128 = pneg %p29
      $region26: #{forward.1} parent=23 // pred_check_branch
        %130 = sbr.rel (%p128) target = $region28
      $region27: #{forward.1} parent=23 // pred_region
        %p131 = scmp.lt.s32.totalorder %s9, 1
        %s132 = scalar_select %p131, %s9, 1
        %s133 = smul.addr %s132, 5
        %s134 = smul.addr %s133, 2
        %s135 = scalar_lea.vmem %s0, %s134
      $region28: #{forward.1} parent=23 // pred_fallthru
        _
    $region24: #{forward.1} parent=5 // pred_fallthru
      _
    %p136 = scmp.le.s32.totalorder 1, %s9
    %p137 = scmp.lt.s32.totalorder %s9, 3
    %p138 = pnand %p136, %p137
    %p139 = pneg %p138
    // Predicated region
    $region29: #{forward.1} parent=5 // pred_check
      _
    $region30: #{forward.1} parent=5 // pred_check_branch
      %141 = sbr.rel (%p138) target = $region32
    $region31: #{forward.1} parent=5 // pred_region
      %s142 = ssub.s32 %s9, 1
      %p143 = scmp.lt.s32.totalorder %s14, 1
      %s144 = scalar_select %p143, %s14, 1
      %s145 = smul.addr %s144, 5
      %s146 = smul.addr %s145, 2
      %s147 = scalar_lea.vmem %s0, %s146
      %p148 = pneg %p35
      %p149 = pneg %p32
      %p150 = pneg %p56
      %p151 = pneg %p53
      %p152 = pneg %p77
      %p153 = pneg %p74
      %p154 = pneg %p103
      %p155 = pneg %p100
      %p156 = scmp.lt.s32.totalorder %s14, 1
      %s157 = scalar_select %p156, %s14, 1
      %s158 = smul.addr %s157, 3
      %s159 = smul.addr %s158, 4
      %s160 = scalar_lea.vmem %s3, %s159
      %p161 = scmp.lt.s32.totalorder %s14, 1
      %s162 = scalar_select %p161, %s14, 1
      %s163 = smul.addr %s162, 5
      %s164 = smul.addr %s163, 2
      %s165 = scalar_lea.vmem %s0, %s164
      %p166 = scmp.lt.s32.totalorder %s14, 1
      %s167 = scalar_select %p166, %s14, 1
      %s168 = smul.addr %s167, 3
      %s169 = smul.addr %s168, 4
      %s170 = scalar_lea.vmem %s3, %s169
      %v172 = vld [vmem:[%s165] sm:$0xff]
      %v174 = vcombine.high %v172, %v172
      %v176 = vunpack.c.l.s4 1983009808
      %v177 = vunpack.c.0.s8 %v176
      %v178 = vlaneseq
      %v179 = vshrl.u32 %v178, 7
      %v180 = vsub.s32 %v177, %v179
      %v181 = vrot.slane %v172, %v180
      %v183 = vunpack.c.l.s4 1983009808
      %v184 = vunpack.c.0.s8 %v183
      %v185 = vlaneseq
      %v186 = vshrl.u32 %v185, 7
      %v187 = vsub.s32 %v184, %v186
      %v188 = vrot.slane %v174, %v187
      %189 = vrot.lane.b32.xlu0 %v181, 53
      %v190 = vpop.permute.xlu0 %189
      %191 = vrot.lane.b32.xlu0 %v188, 53
      %v192 = vpop.permute.xlu0 %191
      %v193 = vrot.slane %v190, 4
      %v194 = vrot.slane %v192, 4
      %vm195 = vcmask 1043456
      %v196 = vsel %vm195, %v193, %v194
      %vm197 = vcmask 433152
      %v198 = vsel %vm197, %v190, %v196
      %v199 = vsel %vm197, %v192, %v194
      %202 = vst [vmem:[#allocation2] sm:$0x33] %v198
      %203 = vst [vmem:[#allocation2 + $0x8] sm:$0x3] %v199
      %v204 = vld [vmem:[%s165] sm:$0xff]
      %v206 = vcombine.low %v204, %v204
      %v208 = vunpack.c.l.s4 1983009808
      %v209 = vunpack.c.0.s8 %v208
      %v210 = vlaneseq
      %v211 = vshrl.u32 %v210, 7
      %v212 = vsub.s32 %v209, %v211
      %v213 = vrot.slane %v206, %v212
      %v215 = vunpack.c.l.s4 1983009808
      %v216 = vunpack.c.0.s8 %v215
      %v217 = vlaneseq
      %v218 = vshrl.u32 %v217, 7
      %v219 = vsub.s32 %v216, %v218
      %v220 = vrot.slane %v204, %v219
      %221 = vrot.lane.b32.xlu0 %v213, 52
      %v222 = vpop.permute.xlu0 %221
      %223 = vrot.lane.b32.xlu0 %v220, 52
      %v224 = vpop.permute.xlu0 %223
      %v225 = vrot.slane %v222, 4
      %v226 = vrot.slane %v224, 4
      %v227 = vsel %vm195, %v225, %v226
      %vm228 = vcmask 424960
      %v229 = vsel %vm228, %v222, %v227
      %v230 = vsel %vm228, %v224, %v226
      %233 = vst [vmem:[#allocation2] sm:$0xcc] %v229
      %234 = vst [vmem:[#allocation2 + $0x8] sm:$0xc] %v230
      %v235 = vld [vmem:[%s165] sm:$0xff]
      %v237 = vcombine.high %v235, %v235
      %v239 = vunpack.c.l.s4 1983009808
      %v240 = vunpack.c.0.s8 %v239
      %v241 = vlaneseq
      %v242 = vshrl.u32 %v241, 7
      %v243 = vsub.s32 %v240, %v242
      %v244 = vrot.slane %v235, %v243
      %v246 = vunpack.c.l.s4 1983009808
      %v247 = vunpack.c.0.s8 %v246
      %v248 = vlaneseq
      %v249 = vshrl.u32 %v248, 7
      %v250 = vsub.s32 %v247, %v249
      %v251 = vrot.slane %v237, %v250
      %252 = vrot.lane.b32.xlu0 %v244, 51
      %v253 = vpop.permute.xlu0 %252
      %254 = vrot.lane.b32.xlu0 %v251, 51
      %v255 = vpop.permute.xlu0 %254
      %v256 = vrot.slane %v253, 4
      %v257 = vrot.slane %v255, 4
      %v258 = vsel %vm195, %v256, %v257
      %vm259 = vcmask 416768
      %v260 = vsel %vm259, %v253, %v258
      %v261 = vsel %vm259, %v255, %v257
      %264 = vst [vmem:[#allocation2 + $0xc] sm:$0x33] %v260
      %265 = vst [vmem:[#allocation2 + $0x14] sm:$0x3] %v261
      %v266 = vld [vmem:[%s165] sm:$0xff]
      %v268 = vcombine.low %v266, %v266
      %v270 = vunpack.c.l.s4 1983009808
      %v271 = vunpack.c.0.s8 %v270
      %v272 = vlaneseq
      %v273 = vshrl.u32 %v272, 7
      %v274 = vsub.s32 %v271, %v273
      %v275 = vrot.slane %v268, %v274
      %v277 = vunpack.c.l.s4 1983009808
      %v278 = vunpack.c.0.s8 %v277
      %v279 = vlaneseq
      %v280 = vshrl.u32 %v279, 7
      %v281 = vsub.s32 %v278, %v280
      %v282 = vrot.slane %v266, %v281
      %283 = vrot.lane.b32.xlu0 %v275, 29
      %v284 = vpop.permute.xlu0 %283
      %285 = vrot.lane.b32.xlu0 %v282, 29
      %v286 = vpop.permute.xlu0 %285
      %v287 = vrot.slane %v284, 4
      %v288 = vrot.slane %v286, 4
      %v289 = vsel %vm195, %v287, %v288
      %vm290 = vcmask 236544
      %v291 = vsel %vm290, %v284, %v289
      %v292 = vsel %vm290, %v286, %v288
      %295 = vst [vmem:[#allocation2 + $0xc] sm:$0xcc] %v291
      %296 = vst [vmem:[#allocation2 + $0x14] sm:$0xc] %v292
      %v297 = vld [vmem:[%s165] sm:$0xff]
      %v299 = vcombine.high %v297, %v297
      %v301 = vunpack.c.l.s4 1983009808
      %v302 = vunpack.c.0.s8 %v301
      %v303 = vlaneseq
      %v304 = vshrl.u32 %v303, 7
      %v305 = vsub.s32 %v302, %v304
      %v306 = vrot.slane %v297, %v305
      %v308 = vunpack.c.l.s4 1983009808
      %v309 = vunpack.c.0.s8 %v308
      %v310 = vlaneseq
      %v311 = vshrl.u32 %v310, 7
      %v312 = vsub.s32 %v309, %v311
      %v313 = vrot.slane %v299, %v312
      %314 = vrot.lane.b32.xlu0 %v306, 28
      %v315 = vpop.permute.xlu0 %314
      %316 = vrot.lane.b32.xlu0 %v313, 28
      %v317 = vpop.permute.xlu0 %316
      %v318 = vrot.slane %v315, 4
      %v319 = vrot.slane %v317, 4
      %v320 = vsel %vm195, %v318, %v319
      %vm321 = vcmask 228352
      %v322 = vsel %vm321, %v315, %v320
      %v323 = vsel %vm321, %v317, %v319
      %326 = vst [vmem:[#allocation2 + $0x18] sm:$0x33] %v322
      %327 = vst [vmem:[#allocation2 + $0x20] sm:$0x3] %v323
      %v328 = vld [vmem:[%s165] sm:$0xff]
      %v330 = vcombine.low %v328, %v328
      %v332 = vunpack.c.l.s4 1983009808
      %v333 = vunpack.c.0.s8 %v332
      %v334 = vlaneseq
      %v335 = vshrl.u32 %v334, 7
      %v336 = vsub.s32 %v333, %v335
      %v337 = vrot.slane %v330, %v336
      %v339 = vunpack.c.l.s4 1983009808
      %v340 = vunpack.c.0.s8 %v339
      %v341 = vlaneseq
      %v342 = vshrl.u32 %v341, 7
      %v343 = vsub.s32 %v340, %v342
      %v344 = vrot.slane %v328, %v343
      %345 = vrot.lane.b32.xlu0 %v337, 27
      %v346 = vpop.permute.xlu0 %345
      %347 = vrot.lane.b32.xlu0 %v344, 27
      %v348 = vpop.permute.xlu0 %347
      %v349 = vrot.slane %v346, 4
      %v350 = vrot.slane %v348, 4
      %v351 = vsel %vm195, %v349, %v350
      %vm352 = vcmask 220160
      %v353 = vsel %vm352, %v346, %v351
      %v354 = vsel %vm352, %v348, %v350
      %357 = vst [vmem:[#allocation2 + $0x18] sm:$0xcc] %v353
      %358 = vst [vmem:[#allocation2 + $0x20] sm:$0xc] %v354
      %v359 = vld [vmem:[%s165] sm:$0xff]
      %v361 = vcombine.high %v359, %v359
      %v363 = vunpack.c.l.s4 1983009808
      %v364 = vunpack.c.0.s8 %v363
      %v365 = vlaneseq
      %v366 = vshrl.u32 %v365, 7
      %v367 = vsub.s32 %v364, %v366
      %v368 = vrot.slane %v359, %v367
      %v370 = vunpack.c.l.s4 1983009808
      %v371 = vunpack.c.0.s8 %v370
      %v372 = vlaneseq
      %v373 = vshrl.u32 %v372, 7
      %v374 = vsub.s32 %v371, %v373
      %v375 = vrot.slane %v361, %v374
      %376 = vrot.lane.b32.xlu0 %v368, 5
      %v377 = vpop.permute.xlu0 %376
      %378 = vrot.lane.b32.xlu0 %v375, 5
      %v379 = vpop.permute.xlu0 %378
      %v380 = vrot.slane %v377, 4
      %v381 = vrot.slane %v379, 4
      %v382 = vsel %vm195, %v380, %v381
      %vm383 = vcmask 39936
      %v384 = vsel %vm383, %v377, %v382
      %v385 = vsel %vm383, %v379, %v381
      %388 = vst [vmem:[#allocation2 + $0x24] sm:$0x33] %v384
      %389 = vst [vmem:[#allocation2 + $0x2c] sm:$0x3] %v385
      %v390 = vld [vmem:[%s165] sm:$0xff]
      %v392 = vcombine.low %v390, %v390
      %v394 = vunpack.c.l.s4 1983009808
      %v395 = vunpack.c.0.s8 %v394
      %v396 = vlaneseq
      %v397 = vshrl.u32 %v396, 7
      %v398 = vsub.s32 %v395, %v397
      %v399 = vrot.slane %v392, %v398
      %v401 = vunpack.c.l.s4 1983009808
      %v402 = vunpack.c.0.s8 %v401
      %v403 = vlaneseq
      %v404 = vshrl.u32 %v403, 7
      %v405 = vsub.s32 %v402, %v404
      %v406 = vrot.slane %v390, %v405
      %407 = vrot.lane.b32.xlu0 %v399, 4
      %v408 = vpop.permute.xlu0 %407
      %409 = vrot.lane.b32.xlu0 %v406, 4
      %v410 = vpop.permute.xlu0 %409
      %v411 = vrot.slane %v408, 4
      %v412 = vrot.slane %v410, 4
      %v413 = vsel %vm195, %v411, %v412
      %vm414 = vcmask 31744
      %v415 = vsel %vm414, %v408, %v413
      %v416 = vsel %vm414, %v410, %v412
      %419 = vst [vmem:[#allocation2 + $0x24] sm:$0xcc] %v415
      %420 = vst [vmem:[#allocation2 + $0x2c] sm:$0xc] %v416
      %v421 = vld [vmem:[%s165] sm:$0xff]
      %v423 = vcombine.high %v421, %v421
      %v425 = vunpack.c.l.s4 1983009808
      %v426 = vunpack.c.0.s8 %v425
      %v427 = vlaneseq
      %v428 = vshrl.u32 %v427, 7
      %v429 = vsub.s32 %v426, %v428
      %v430 = vrot.slane %v421, %v429
      %v432 = vunpack.c.l.s4 1983009808
      %v433 = vunpack.c.0.s8 %v432
      %v434 = vlaneseq
      %v435 = vshrl.u32 %v434, 7
      %v436 = vsub.s32 %v433, %v435
      %v437 = vrot.slane %v423, %v436
      %438 = vrot.lane.b32.xlu0 %v430, 3
      %v439 = vpop.permute.xlu0 %438
      %440 = vrot.lane.b32.xlu0 %v437, 3
      %v441 = vpop.permute.xlu0 %440
      %v442 = vrot.slane %v439, 4
      %v443 = vrot.slane %v441, 4
      %v444 = vsel %vm195, %v442, %v443
      %vm445 = vcmask 23552
      %v446 = vsel %vm445, %v439, %v444
      %v447 = vsel %vm445, %v441, %v443
      %450 = vst [vmem:[#allocation2 + $0x30] sm:$0x33] %v446
      %451 = vst [vmem:[#allocation2 + $0x38] sm:$0x3] %v447
      %v452 = vld [vmem:[%s165] sm:$0xff]
      %v454 = vcombine.low %v452, %v452
      %v456 = vunpack.c.l.s4 1983009808
      %v457 = vunpack.c.0.s8 %v456
      %v458 = vlaneseq
      %v459 = vshrl.u32 %v458, 7
      %v460 = vsub.s32 %v457, %v459
      %v461 = vrot.slane %v454, %v460
      %v463 = vunpack.c.l.s4 1983009808
      %v464 = vunpack.c.0.s8 %v463
      %v465 = vlaneseq
      %v466 = vshrl.u32 %v465, 7
      %v467 = vsub.s32 %v464, %v466
      %v468 = vrot.slane %v452, %v467
      %469 = vrot.lane.b32.xlu0 %v461, 78
      %v470 = vpop.permute.xlu0 %469
      %471 = vrot.lane.b32.xlu0 %v468, 78
      %v472 = vpop.permute.xlu0 %471
      %v473 = vrot.slane %v470, 4
      %v474 = vrot.slane %v472, 4
      %v475 = vsel %vm195, %v473, %v474
      %vm476 = vcmask 637952
      %v477 = vsel %vm476, %v470, %v475
      %v478 = vsel %vm476, %v472, %v474
      %481 = vst [vmem:[#allocation2 + $0x30] sm:$0xcc] %v477
      %482 = vst [vmem:[#allocation2 + $0x38] sm:$0xc] %v478
      %v483 = vld [vmem:[%s165] sm:$0xff]
      %v485 = vcombine.high %v483, %v483
      %v487 = vunpack.c.l.s4 1983009808
      %v488 = vunpack.c.0.s8 %v487
      %v489 = vlaneseq
      %v490 = vshrl.u32 %v489, 7
      %v491 = vsub.s32 %v488, %v490
      %v492 = vrot.slane %v483, %v491
      %v494 = vunpack.c.l.s4 1983009808
      %v495 = vunpack.c.0.s8 %v494
      %v496 = vlaneseq
      %v497 = vshrl.u32 %v496, 7
      %v498 = vsub.s32 %v495, %v497
      %v499 = vrot.slane %v485, %v498
      %500 = vrot.lane.b32.xlu0 %v492, 76
      %v501 = vpop.permute.xlu0 %500
      %502 = vrot.lane.b32.xlu0 %v499, 76
      %v503 = vpop.permute.xlu0 %502
      %v504 = vrot.slane %v501, 4
      %v505 = vrot.slane %v503, 4
      %v506 = vsel %vm195, %v504, %v505
      %vm507 = vcmask 621568
      %v508 = vsel %vm507, %v501, %v506
      %v509 = vsel %vm507, %v503, %v505
      %512 = vst [vmem:[#allocation2 + $0x3c] sm:$0x33] %v508
      %513 = vst [vmem:[#allocation2 + $0x44] sm:$0x3] %v509
      %v514 = vld [vmem:[%s165] sm:$0xff]
      %v516 = vcombine.low %v514, %v514
      %v518 = vunpack.c.l.s4 1983009808
      %v519 = vunpack.c.0.s8 %v518
      %v520 = vlaneseq
      %v521 = vshrl.u32 %v520, 7
      %v522 = vsub.s32 %v519, %v521
      %v523 = vrot.slane %v516, %v522
      %v525 = vunpack.c.l.s4 1983009808
      %v526 = vunpack.c.0.s8 %v525
      %v527 = vlaneseq
      %v528 = vshrl.u32 %v527, 7
      %v529 = vsub.s32 %v526, %v528
      %v530 = vrot.slane %v514, %v529
      %531 = vrot.lane.b32.xlu0 %v523, 74
      %v532 = vpop.permute.xlu0 %531
      %533 = vrot.lane.b32.xlu0 %v530, 74
      %v534 = vpop.permute.xlu0 %533
      %v535 = vrot.slane %v532, 4
      %v536 = vrot.slane %v534, 4
      %v537 = vsel %vm195, %v535, %v536
      %vm538 = vcmask 605184
      %v539 = vsel %vm538, %v532, %v537
      %v540 = vsel %vm538, %v534, %v536
      %543 = vst [vmem:[#allocation2 + $0x3c] sm:$0xcc] %v539
      %544 = vst [vmem:[#allocation2 + $0x44] sm:$0xc] %v540
      %v545 = vld [vmem:[%s165] sm:$0xff]
      %v547 = vcombine.high %v545, %v545
      %v549 = vunpack.c.l.s4 1983009808
      %v550 = vunpack.c.0.s8 %v549
      %v551 = vlaneseq
      %v552 = vshrl.u32 %v551, 7
      %v553 = vsub.s32 %v550, %v552
      %v554 = vrot.slane %v545, %v553
      %v556 = vunpack.c.l.s4 1983009808
      %v557 = vunpack.c.0.s8 %v556
      %v558 = vlaneseq
      %v559 = vshrl.u32 %v558, 7
      %v560 = vsub.s32 %v557, %v559
      %v561 = vrot.slane %v547, %v560
      %562 = vrot.lane.b32.xlu0 %v554, 30
      %v563 = vpop.permute.xlu0 %562
      %564 = vrot.lane.b32.xlu0 %v561, 30
      %v565 = vpop.permute.xlu0 %564
      %v566 = vrot.slane %v563, 4
      %v567 = vrot.slane %v565, 4
      %v568 = vsel %vm195, %v566, %v567
      %vm569 = vcmask 244736
      %v570 = vsel %vm569, %v563, %v568
      %v571 = vsel %vm569, %v565, %v567
      %574 = vst [vmem:[#allocation2 + $0x48] sm:$0x33] %v570
      %575 = vst [vmem:[#allocation2 + $0x50] sm:$0x3] %v571
      %v576 = vld [vmem:[%s165] sm:$0xff]
      %v578 = vcombine.low %v576, %v576
      %v580 = vunpack.c.l.s4 1983009808
      %v581 = vunpack.c.0.s8 %v580
      %v582 = vlaneseq
      %v583 = vshrl.u32 %v582, 7
      %v584 = vsub.s32 %v581, %v583
      %v585 = vrot.slane %v578, %v584
      %v587 = vunpack.c.l.s4 1983009808
      %v588 = vunpack.c.0.s8 %v587
      %v589 = vlaneseq
      %v590 = vshrl.u32 %v589, 7
      %v591 = vsub.s32 %v588, %v590
      %v592 = vrot.slane %v576, %v591
      %593 = vrot.lane.b32.xlu0 %v585, 28
      %v594 = vpop.permute.xlu0 %593
      %595 = vrot.lane.b32.xlu0 %v592, 28
      %v596 = vpop.permute.xlu0 %595
      %v597 = vrot.slane %v594, 4
      %v598 = vrot.slane %v596, 4
      %v599 = vsel %vm195, %v597, %v598
      %v600 = vsel %vm321, %v594, %v599
      %v601 = vsel %vm321, %v596, %v598
      %604 = vst [vmem:[#allocation2 + $0x48] sm:$0xcc] %v600
      %605 = vst [vmem:[#allocation2 + $0x50] sm:$0xc] %v601
      %v606 = vld [vmem:[%s165] sm:$0xff]
      %v608 = vcombine.high %v606, %v606
      %v610 = vunpack.c.l.s4 1983009808
      %v611 = vunpack.c.0.s8 %v610
      %v612 = vlaneseq
      %v613 = vshrl.u32 %v612, 7
      %v614 = vsub.s32 %v611, %v613
      %v615 = vrot.slane %v606, %v614
      %v617 = vunpack.c.l.s4 1983009808
      %v618 = vunpack.c.0.s8 %v617
      %v619 = vlaneseq
      %v620 = vshrl.u32 %v619, 7
      %v621 = vsub.s32 %v618, %v620
      %v622 = vrot.slane %v608, %v621
      %623 = vrot.lane.b32.xlu0 %v615, 26
      %v624 = vpop.permute.xlu0 %623
      %625 = vrot.lane.b32.xlu0 %v622, 26
      %v626 = vpop.permute.xlu0 %625
      %v627 = vrot.slane %v624, 4
      %v628 = vrot.slane %v626, 4
      %v629 = vsel %vm195, %v627, %v628
      %vm630 = vcmask 211968
      %v631 = vsel %vm630, %v624, %v629
      %v632 = vsel %vm630, %v626, %v628
      %635 = vst [vmem:[#allocation2 + $0x54] sm:$0x33] %v631
      %636 = vst [vmem:[#allocation2 + $0x5c] sm:$0x3] %v632
      %v637 = vld [vmem:[%s165 + $0x2] sm:$0xff]
      %v639 = vcombine.low %v637, %v637
      %v641 = vunpack.c.l.s4 1983009808
      %v642 = vunpack.c.0.s8 %v641
      %v643 = vlaneseq
      %v644 = vshrl.u32 %v643, 7
      %v645 = vsub.s32 %v642, %v644
      %v646 = vrot.slane %v639, %v645
      %v648 = vunpack.c.l.s4 1983009808
      %v649 = vunpack.c.0.s8 %v648
      %v650 = vlaneseq
      %v651 = vshrl.u32 %v650, 7
      %v652 = vsub.s32 %v649, %v651
      %v653 = vrot.slane %v637, %v652
      %654 = vrot.lane.b32.xlu0 %v646, 110
      %v655 = vpop.permute.xlu0 %654
      %656 = vrot.lane.b32.xlu0 %v653, 110
      %v657 = vpop.permute.xlu0 %656
      %v658 = vrot.slane %v655, 4
      %v659 = vrot.slane %v657, 4
      %v660 = vsel %vm195, %v658, %v659
      %vm661 = vcmask 900096
      %v662 = vsel %vm661, %v655, %v660
      %v663 = vsel %vm661, %v657, %v659
      %666 = vst [vmem:[#allocation2 + $0x54] sm:$0xcc] %v662
      %667 = vst [vmem:[#allocation2 + $0x5c] sm:$0xc] %v663
      %v668 = vld [vmem:[%s165 + $0x2] sm:$0xff]
      %v670 = vcombine.high %v668, %v668
      %v672 = vunpack.c.l.s4 1983009808
      %v673 = vunpack.c.0.s8 %v672
      %v674 = vlaneseq
      %v675 = vshrl.u32 %v674, 7
      %v676 = vsub.s32 %v673, %v675
      %v677 = vrot.slane %v668, %v676
      %v679 = vunpack.c.l.s4 1983009808
      %v680 = vunpack.c.0.s8 %v679
      %v681 = vlaneseq
      %v682 = vshrl.u32 %v681, 7
      %v683 = vsub.s32 %v680, %v682
      %v684 = vrot.slane %v670, %v683
      %685 = vrot.lane.b32.xlu0 %v677, 108
      %v686 = vpop.permute.xlu0 %685
      %687 = vrot.lane.b32.xlu0 %v684, 108
      %v688 = vpop.permute.xlu0 %687
      %v689 = vrot.slane %v686, 4
      %v690 = vrot.slane %v688, 4
      %v691 = vsel %vm195, %v689, %v690
      %vm692 = vcmask 883712
      %v693 = vsel %vm692, %v686, %v691
      %v694 = vsel %vm692, %v688, %v690
      %697 = vst [vmem:[#allocation2 + $0x60] sm:$0x33] %v693
      %698 = vst [vmem:[#allocation2 + $0x68] sm:$0x3] %v694
      %v699 = vld [vmem:[%s165 + $0x2] sm:$0xff]
      %v701 = vcombine.low %v699, %v699
      %v703 = vunpack.c.l.s4 1983009808
      %v704 = vunpack.c.0.s8 %v703
      %v705 = vlaneseq
      %v706 = vshrl.u32 %v705, 7
      %v707 = vsub.s32 %v704, %v706
      %v708 = vrot.slane %v701, %v707
      %v710 = vunpack.c.l.s4 1983009808
      %v711 = vunpack.c.0.s8 %v710
      %v712 = vlaneseq
      %v713 = vshrl.u32 %v712, 7
      %v714 = vsub.s32 %v711, %v713
      %v715 = vrot.slane %v699, %v714
      %716 = vrot.lane.b32.xlu0 %v708, 106
      %v717 = vpop.permute.xlu0 %716
      %718 = vrot.lane.b32.xlu0 %v715, 106
      %v719 = vpop.permute.xlu0 %718
      %v720 = vrot.slane %v717, 4
      %v721 = vrot.slane %v719, 4
      %v722 = vsel %vm195, %v720, %v721
      %vm723 = vcmask 867328
      %v724 = vsel %vm723, %v717, %v722
      %v725 = vsel %vm723, %v719, %v721
      %728 = vst [vmem:[#allocation2 + $0x60] sm:$0xcc] %v724
      %729 = vst [vmem:[#allocation2 + $0x68] sm:$0xc] %v725
      %v730 = vld [vmem:[%s165] sm:$0x3f]
      %v732 = vcombine.high %v730, %v730
      %v734 = vunpack.c.l.s4 1983009808
      %v735 = vunpack.c.0.s8 %v734
      %v736 = vlaneseq
      %v737 = vshrl.u32 %v736, 7
      %v738 = vsub.s32 %v735, %v737
      %v739 = vrot.slane %v730, %v738
      %v741 = vunpack.c.l.s4 1983009808
      %v742 = vunpack.c.0.s8 %v741
      %v743 = vlaneseq
      %v744 = vshrl.u32 %v743, 7
      %v745 = vsub.s32 %v742, %v744
      %v746 = vrot.slane %v732, %v745
      %749 = vst [vmem:[#allocation2 + $0x6c] sm:$0x33] %v739
      %750 = vst [vmem:[#allocation2 + $0x74] sm:$0x3] %v746
      %v751 = vld [vmem:[%s165] sm:$0xff]
      %v753 = vcombine.low %v751, %v751
      %v755 = vunpack.c.l.s4 1983009808
      %v756 = vunpack.c.0.s8 %v755
      %v757 = vlaneseq
      %v758 = vshrl.u32 %v757, 7
      %v759 = vsub.s32 %v756, %v758
      %v760 = vrot.slane %v753, %v759
      %v762 = vunpack.c.l.s4 1983009808
      %v763 = vunpack.c.0.s8 %v762
      %v764 = vlaneseq
      %v765 = vshrl.u32 %v764, 7
      %v766 = vsub.s32 %v763, %v765
      %v767 = vrot.slane %v751, %v766
      %768 = vrot.lane.b32.xlu0 %v760, 124
      %v769 = vpop.permute.xlu0 %768
      %770 = vrot.lane.b32.xlu0 %v767, 124
      %v771 = vpop.permute.xlu0 %770
      %v772 = vrot.slane %v769, 4
      %v773 = vrot.slane %v771, 4
      %v774 = vsel %vm195, %v772, %v773
      %vm775 = vcmask 1014784
      %v776 = vsel %vm775, %v769, %v774
      %v777 = vsel %vm775, %v771, %v773
      %780 = vst [vmem:[#allocation2 + $0x6c] sm:$0xcc] %v776
      %781 = vst [vmem:[#allocation2 + $0x74] sm:$0xc] %v777
      %v782 = vld [vmem:[%s165] sm:$0xff]
      %v784 = vcombine.high %v782, %v782
      %v786 = vunpack.c.l.s4 1983009808
      %v787 = vunpack.c.0.s8 %v786
      %v788 = vlaneseq
      %v789 = vshrl.u32 %v788, 7
      %v790 = vsub.s32 %v787, %v789
      %v791 = vrot.slane %v782, %v790
      %v793 = vunpack.c.l.s4 1983009808
      %v794 = vunpack.c.0.s8 %v793
      %v795 = vlaneseq
      %v796 = vshrl.u32 %v795, 7
      %v797 = vsub.s32 %v794, %v796
      %v798 = vrot.slane %v784, %v797
      %799 = vrot.lane.b32.xlu0 %v791, 120
      %v800 = vpop.permute.xlu0 %799
      %801 = vrot.lane.b32.xlu0 %v798, 120
      %v802 = vpop.permute.xlu0 %801
      %v803 = vrot.slane %v800, 4
      %v804 = vrot.slane %v802, 4
      %v805 = vsel %vm195, %v803, %v804
      %vm806 = vcmask 982016
      %v807 = vsel %vm806, %v800, %v805
      %v808 = vsel %vm806, %v802, %v804
      %811 = vst [vmem:[#allocation2 + $0x78] sm:$0x33] %v807
      %812 = vst [vmem:[#allocation2 + $0x80] sm:$0x3] %v808
      %v813 = vld [vmem:[%s165] sm:$0xff]
      %v815 = vcombine.low %v813, %v813
      %v817 = vunpack.c.l.s4 1983009808
      %v818 = vunpack.c.0.s8 %v817
      %v819 = vlaneseq
      %v820 = vshrl.u32 %v819, 7
      %v821 = vsub.s32 %v818, %v820
      %v822 = vrot.slane %v815, %v821
      %v824 = vunpack.c.l.s4 1983009808
      %v825 = vunpack.c.0.s8 %v824
      %v826 = vlaneseq
      %v827 = vshrl.u32 %v826, 7
      %v828 = vsub.s32 %v825, %v827
      %v829 = vrot.slane %v813, %v828
      %830 = vrot.lane.b32.xlu0 %v822, 32
      %v831 = vpop.permute.xlu0 %830
      %832 = vrot.lane.b32.xlu0 %v829, 32
      %v833 = vpop.permute.xlu0 %832
      %v834 = vrot.slane %v831, 4
      %v835 = vrot.slane %v833, 4
      %v836 = vsel %vm195, %v834, %v835
      %vm837 = vcmask 261120
      %v838 = vsel %vm837, %v831, %v836
      %v839 = vsel %vm837, %v833, %v835
      %842 = vst [vmem:[#allocation2 + $0x78] sm:$0xcc] %v838
      %843 = vst [vmem:[#allocation2 + $0x80] sm:$0xc] %v839
      %v844 = vld [vmem:[%s165] sm:$0xff]
      %v846 = vcombine.high %v844, %v844
      %v848 = vunpack.c.l.s4 1983009808
      %v849 = vunpack.c.0.s8 %v848
      %v850 = vlaneseq
      %v851 = vshrl.u32 %v850, 7
      %v852 = vsub.s32 %v849, %v851
      %v853 = vrot.slane %v844, %v852
      %v855 = vunpack.c.l.s4 1983009808
      %v856 = vunpack.c.0.s8 %v855
      %v857 = vlaneseq
      %v858 = vshrl.u32 %v857, 7
      %v859 = vsub.s32 %v856, %v858
      %v860 = vrot.slane %v846, %v859
      %861 = vrot.lane.b32.xlu0 %v853, 28
      %v862 = vpop.permute.xlu0 %861
      %863 = vrot.lane.b32.xlu0 %v860, 28
      %v864 = vpop.permute.xlu0 %863
      %v865 = vrot.slane %v862, 4
      %v866 = vrot.slane %v864, 4
      %v867 = vsel %vm195, %v865, %v866
      %v868 = vsel %vm321, %v862, %v867
      %v869 = vsel %vm321, %v864, %v866
      %872 = vst [vmem:[#allocation2 + $0x84] sm:$0x33] %v868
      %873 = vst [vmem:[#allocation2 + $0x8c] sm:$0x3] %v869
      %v874 = vld [vmem:[%s165] sm:$0xff]
      %v876 = vcombine.low %v874, %v874
      %v878 = vunpack.c.l.s4 1983009808
      %v879 = vunpack.c.0.s8 %v878
      %v880 = vlaneseq
      %v881 = vshrl.u32 %v880, 7
      %v882 = vsub.s32 %v879, %v881
      %v883 = vrot.slane %v876, %v882
      %v885 = vunpack.c.l.s4 1983009808
      %v886 = vunpack.c.0.s8 %v885
      %v887 = vlaneseq
      %v888 = vshrl.u32 %v887, 7
      %v889 = vsub.s32 %v886, %v888
      %v890 = vrot.slane %v874, %v889
      %891 = vrot.lane.b32.xlu0 %v883, 24
      %v892 = vpop.permute.xlu0 %891
      %893 = vrot.lane.b32.xlu0 %v890, 24
      %v894 = vpop.permute.xlu0 %893
      %v895 = vrot.slane %v892, 4
      %v896 = vrot.slane %v894, 4
      %v897 = vsel %vm195, %v895, %v896
      %vm898 = vcmask 195584
      %v899 = vsel %vm898, %v892, %v897
      %v900 = vsel %vm898, %v894, %v896
      %903 = vst [vmem:[#allocation2 + $0x84] sm:$0xcc] %v899
      %904 = vst [vmem:[#allocation2 + $0x8c] sm:$0xc] %v900
      %v905 = vld [vmem:[%s165 + $0x2] sm:$0xff]
      %v907 = vcombine.high %v905, %v905
      %v909 = vunpack.c.l.s4 1983009808
      %v910 = vunpack.c.0.s8 %v909
      %v911 = vlaneseq
      %v912 = vshrl.u32 %v911, 7
      %v913 = vsub.s32 %v910, %v912
      %v914 = vrot.slane %v905, %v913
      %v916 = vunpack.c.l.s4 1983009808
      %v917 = vunpack.c.0.s8 %v916
      %v918 = vlaneseq
      %v919 = vshrl.u32 %v918, 7
      %v920 = vsub.s32 %v917, %v919
      %v921 = vrot.slane %v907, %v920
      %922 = vrot.lane.b32.xlu0 %v914, 64
      %v923 = vpop.permute.xlu0 %922
      %924 = vrot.lane.b32.xlu0 %v921, 64
      %v925 = vpop.permute.xlu0 %924
      %v926 = vrot.slane %v923, 4
      %v927 = vrot.slane %v925, 4
      %v928 = vsel %vm195, %v926, %v927
      %vm929 = vcmask 523264
      %v930 = vsel %vm929, %v923, %v928
      %v931 = vsel %vm929, %v925, %v927
      %934 = vst [vmem:[#allocation2 + $0x90] sm:$0x33] %v930
      %935 = vst [vmem:[#allocation2 + $0x98] sm:$0x3] %v931
      %v936 = vld [vmem:[%s165 + $0x2] sm:$0xff]
      %v938 = vcombine.low %v936, %v936
      %v940 = vunpack.c.l.s4 1983009808
      %v941 = vunpack.c.0.s8 %v940
      %v942 = vlaneseq
      %v943 = vshrl.u32 %v942, 7
      %v944 = vsub.s32 %v941, %v943
      %v945 = vrot.slane %v938, %v944
      %v947 = vunpack.c.l.s4 1983009808
      %v948 = vunpack.c.0.s8 %v947
      %v949 = vlaneseq
      %v950 = vshrl.u32 %v949, 7
      %v951 = vsub.s32 %v948, %v950
      %v952 = vrot.slane %v936, %v951
      %953 = vrot.lane.b32.xlu0 %v945, 60
      %v954 = vpop.permute.xlu0 %953
      %955 = vrot.lane.b32.xlu0 %v952, 60
      %v956 = vpop.permute.xlu0 %955
      %v957 = vrot.slane %v954, 4
      %v958 = vrot.slane %v956, 4
      %v959 = vsel %vm195, %v957, %v958
      %vm960 = vcmask 490496
      %v961 = vsel %vm960, %v954, %v959
      %v962 = vsel %vm960, %v956, %v958
      %965 = vst [vmem:[#allocation2 + $0x90] sm:$0xcc] %v961
      %966 = vst [vmem:[#allocation2 + $0x98] sm:$0xc] %v962
      %v967 = vld [vmem:[%s165 + $0x2] sm:$0xff]
      %v969 = vcombine.high %v967, %v967
      %v971 = vunpack.c.l.s4 1983009808
      %v972 = vunpack.c.0.s8 %v971
      %v973 = vlaneseq
      %v974 = vshrl.u32 %v973, 7
      %v975 = vsub.s32 %v972, %v974
      %v976 = vrot.slane %v967, %v975
      %v978 = vunpack.c.l.s4 1983009808
      %v979 = vunpack.c.0.s8 %v978
      %v980 = vlaneseq
      %v981 = vshrl.u32 %v980, 7
      %v982 = vsub.s32 %v979, %v981
      %v983 = vrot.slane %v969, %v982
      %984 = vrot.lane.b32.xlu0 %v976, 56
      %v985 = vpop.permute.xlu0 %984
      %986 = vrot.lane.b32.xlu0 %v983, 56
      %v987 = vpop.permute.xlu0 %986
      %v988 = vrot.slane %v985, 4
      %v989 = vrot.slane %v987, 4
      %v990 = vsel %vm195, %v988, %v989
      %vm991 = vcmask 457728
      %v992 = vsel %vm991, %v985, %v990
      %v993 = vsel %vm991, %v987, %v989
      %996 = vst [vmem:[#allocation2 + $0x9c] sm:$0x33] %v992
      %997 = vst [vmem:[#allocation2 + $0xa4] sm:$0x3] %v993
      %v998 = vld [vmem:[%s1] sm:$0x3]
      %v999 = vld [vmem:[#allocation2] sm:$0xff]
      %v1000 = vld [vmem:[#allocation2 + $0x8] sm:$0xf]
      %v1001 = vld [vmem:[#allocation2 + $0xc] sm:$0xff]
      %v1002 = vld [vmem:[#allocation2 + $0x14] sm:$0xf]
      %v1003 = vld [vmem:[#allocation2 + $0x18] sm:$0xff]
      %v1004 = vld [vmem:[#allocation2 + $0x20] sm:$0xf]
      %v1005 = vld [vmem:[#allocation2 + $0x24] sm:$0xff]
      %v1006 = vld [vmem:[#allocation2 + $0x2c] sm:$0xf]
      %v1007 = vld [vmem:[#allocation2 + $0x30] sm:$0xff]
      %v1008 = vld [vmem:[#allocation2 + $0x38] sm:$0xf]
      %v1009 = vld [vmem:[#allocation2 + $0x3c] sm:$0xff]
      %v1010 = vld [vmem:[#allocation2 + $0x44] sm:$0xf]
      %v1011 = vld [vmem:[#allocation2 + $0x48] sm:$0xff]
      %v1012 = vld [vmem:[#allocation2 + $0x50] sm:$0xf]
      %v1013 = vld [vmem:[#allocation2 + $0x54] sm:$0xff]
      %v1014 = vld [vmem:[#allocation2 + $0x5c] sm:$0xf]
      %v1015 = vld [vmem:[#allocation2 + $0x60] sm:$0xff]
      %v1016 = vld [vmem:[#allocation2 + $0x68] sm:$0xf]
      %v1017 = vld [vmem:[#allocation2 + $0x6c] sm:$0xff]
      %v1018 = vld [vmem:[#allocation2 + $0x74] sm:$0xf]
      %v1019 = vld [vmem:[#allocation2 + $0x78] sm:$0xff]
      %v1020 = vld [vmem:[#allocation2 + $0x80] sm:$0xf]
      %v1021 = vld [vmem:[#allocation2 + $0x84] sm:$0xff]
      %v1022 = vld [vmem:[#allocation2 + $0x8c] sm:$0xf]
      %v1023 = vld [vmem:[#allocation2 + $0x90] sm:$0xff]
      %v1024 = vld [vmem:[#allocation2 + $0x98] sm:$0xf]
      %v1025 = vld [vmem:[#allocation2 + $0x9c] sm:$0x33]
      %v1026 = vld [vmem:[#allocation2 + $0xa4] sm:$0x3]
      %v1027 = vld [vmem:[%s2] sm:$0xf]
      %1029 = vset.pattern.permute.xlu0 0
      %1030 = vperm.xlu0 %1029, %v1027
      %v1031 = vpop.permute.xlu0 %1030
      %v1061 = vunpack.c.l.b16 %v999
      %v1062 = vunpack.c.h.b16 %v999
      %v1063 = vunpack.c.l.b16 %v1000
      %v1064 = vunpack.c.l.b16 %v1001
      %v1065 = vunpack.c.h.b16 %v1001
      %v1066 = vunpack.c.l.b16 %v1002
      %v1067 = vunpack.c.l.b16 %v1003
      %v1068 = vunpack.c.h.b16 %v1003
      %v1069 = vunpack.c.l.b16 %v1004
      %v1070 = vunpack.c.l.b16 %v1005
      %v1071 = vunpack.c.h.b16 %v1005
      %v1072 = vunpack.c.l.b16 %v1006
      %v1073 = vunpack.c.l.b16 %v1007
      %v1074 = vunpack.c.h.b16 %v1007
      %v1075 = vunpack.c.l.b16 %v1008
      %v1076 = vunpack.c.l.b16 %v1009
      %v1077 = vunpack.c.h.b16 %v1009
      %v1078 = vunpack.c.l.b16 %v1010
      %v1079 = vunpack.c.l.b16 %v1011
      %v1080 = vunpack.c.h.b16 %v1011
      %v1081 = vunpack.c.l.b16 %v1012
      %v1082 = vunpack.c.l.b16 %v1013
      %v1083 = vunpack.c.h.b16 %v1013
      %v1084 = vunpack.c.l.b16 %v1014
      %v1085 = vunpack.c.l.b16 %v1015
      %v1086 = vunpack.c.h.b16 %v1015
      %v1087 = vunpack.c.l.b16 %v1016
      %v1088 = vunpack.c.l.b16 %v1017
      %v1089 = vunpack.c.h.b16 %v1017
      %v1090 = vunpack.c.l.b16 %v1018
      %v1091 = vunpack.c.l.b16 %v1019
      %v1092 = vunpack.c.h.b16 %v1019
      %v1093 = vunpack.c.l.b16 %v1020
      %v1094 = vunpack.c.l.b16 %v1021
      %v1095 = vunpack.c.h.b16 %v1021
      %v1096 = vunpack.c.l.b16 %v1022
      %v1097 = vunpack.c.l.b16 %v1023
      %v1098 = vunpack.c.h.b16 %v1023
      %v1099 = vunpack.c.l.b16 %v1024
      %v1100 = vunpack.c.l.b16 %v1025
      %v1101 = vunpack.c.h.b16 %v1025
      %v1102 = vunpack.c.l.b16 %v1026
      %v1103 = vpack.c.b16 %v1064, %v1061
      %v1104 = vpack.c.b16 %v1065, %v1062
      %v1105 = vpack.c.b16 %v1066, %v1063
      %v1106 = vpack.c.b16 %v1070, %v1067
      %v1107 = vpack.c.b16 %v1071, %v1068
      %v1108 = vpack.c.b16 %v1072, %v1069
      %v1109 = vpack.c.b16 %v1076, %v1073
      %v1110 = vpack.c.b16 %v1077, %v1074
      %v1111 = vpack.c.b16 %v1078, %v1075
      %v1112 = vpack.c.b16 %v1082, %v1079
      %v1113 = vpack.c.b16 %v1083, %v1080
      %v1114 = vpack.c.b16 %v1084, %v1081
      %v1115 = vpack.c.b16 %v1088, %v1085
      %v1116 = vpack.c.b16 %v1089, %v1086
      %v1117 = vpack.c.b16 %v1090, %v1087
      %v1118 = vpack.c.b16 %v1094, %v1091
      %v1119 = vpack.c.b16 %v1095, %v1092
      %v1120 = vpack.c.b16 %v1096, %v1093
      %v1121 = vpack.c.b16 %v1100, %v1097
      %v1122 = vpack.c.b16 %v1101, %v1098
      %v1123 = vpack.c.b16 %v1102, %v1099
      %vm1142 = vcmask 883712
      %v1144 = vsel %vm1142, %v998, 0
      %vm1146 = vcmask 1045504
      %v1148 = vsel %vm1146, %v1121, 0
      %v1151 = vsel %vm1146, %v1122, 0
      %v1154 = vsel %vm1146, %v1123, 0
      %1156 = vmatprep.subr.bf16.mxu0 %v1104
      %1157 = vmatpush1.bf16.msra.mxu0 %v1103
      %1158 = vmatprep.subr.bf16.mxu0 %v1107
      %1159 = vmatpush1.bf16.msra.mxu0 %v1106
      %1160 = vmatprep.subr.bf16.mxu0 %v1110
      %1161 = vmatpush1.bf16.msra.mxu0 %v1109
      %1162 = vmatprep.subr.bf16.mxu0 %v1113
      %1163 = vmatpush1.bf16.msra.mxu0 %v1112
      %1164 = vmatprep.subr.bf16.mxu0 %v1116
      %1165 = vmatpush1.bf16.msra.mxu0 %v1115
      %1166 = vmatprep.subr.bf16.mxu0 %v1119
      %1167 = vmatpush1.bf16.msra.mxu0 %v1118
      %1168 = vmatprep.subr.bf16.mxu0 %v1151
      %1169 = vmatpush1.bf16.msra.mxu0 %v1148
      %1170 = vmatprep.subr.bf16.mxu0 0
      %1171 = vmatpush1.bf16.msra.mxu0 0
      %1172 = vmatprep.subr.bf16.mxu0 0
      %1173 = vmatpush1.bf16.msra.mxu0 0
      %1174 = vmatprep.subr.bf16.mxu0 0
      %1175 = vmatpush1.bf16.msra.mxu0 0
      %1176 = vmatprep.subr.bf16.mxu0 0
      %1177 = vmatpush1.bf16.msra.mxu0 0
      %1178 = vmatprep.subr.bf16.mxu0 0
      %1179 = vmatpush1.bf16.msra.mxu0 0
      %1180 = vmatprep.subr.bf16.mxu0 0
      %1181 = vmatpush1.bf16.msra.mxu0 0
      %1182 = vmatprep.subr.bf16.mxu0 0
      %1183 = vmatpush1.bf16.msra.mxu0 0
      %1184 = vmatprep.subr.bf16.mxu0 0
      %1185 = vmatpush1.bf16.msra.mxu0 0
      %1186 = vmatprep.subr.bf16.mxu0 0
      %1187 = vmatpush1.bf16.msra.mxu0 0
      %1188 = vmatprep.mubr.bf16.mxu0 0
      %1189 = vmatmul.mubr.bf16.gmra.mrb[0].mxu0 %v1144
      %v1190 = vpop.f32.mrb[0].mxu0
      %v1191 = vadd.f32 %v1031, %v1190
      %v1192 = vpop.f32.mrb[0].mxu0
      %v1193 = vadd.f32 %v1031, %v1192
      %v1194 = vpop.f32.mrb[0].mxu0
      %v1195 = vpop.f32.mrb[0].mxu0
      %1196 = vdwg.mxu0
      %1197 = vmatprep.subr.bf16.mxu0 0
      %1198 = vmatpush1.bf16.msra.mxu0 %v1105
      %1199 = vmatprep.subr.bf16.mxu0 0
      %1200 = vmatpush1.bf16.msra.mxu0 %v1108
      %1201 = vmatprep.subr.bf16.mxu0 0
      %1202 = vmatpush1.bf16.msra.mxu0 %v1111
      %1203 = vmatprep.subr.bf16.mxu0 0
      %1204 = vmatpush1.bf16.msra.mxu0 %v1114
      %1205 = vmatprep.subr.bf16.mxu0 0
      %1206 = vmatpush1.bf16.msra.mxu0 %v1117
      %1207 = vmatprep.subr.bf16.mxu0 0
      %1208 = vmatpush1.bf16.msra.mxu0 %v1120
      %1209 = vmatprep.subr.bf16.mxu0 0
      %1210 = vmatpush1.bf16.msra.mxu0 %v1154
      %1211 = vmatprep.subr.bf16.mxu0 0
      %1212 = vmatpush1.bf16.msra.mxu0 0
      %1213 = vmatprep.subr.bf16.mxu0 0
      %1214 = vmatpush1.bf16.msra.mxu0 0
      %1215 = vmatprep.subr.bf16.mxu0 0
      %1216 = vmatpush1.bf16.msra.mxu0 0
      %1217 = vmatprep.subr.bf16.mxu0 0
      %1218 = vmatpush1.bf16.msra.mxu0 0
      %1219 = vmatprep.subr.bf16.mxu0 0
      %1220 = vmatpush1.bf16.msra.mxu0 0
      %1221 = vmatprep.subr.bf16.mxu0 0
      %1222 = vmatpush1.bf16.msra.mxu0 0
      %1223 = vmatprep.subr.bf16.mxu0 0
      %1224 = vmatpush1.bf16.msra.mxu0 0
      %1225 = vmatprep.subr.bf16.mxu0 0
      %1226 = vmatpush1.bf16.msra.mxu0 0
      %1227 = vmatprep.subr.bf16.mxu0 0
      %1228 = vmatpush1.bf16.msra.mxu0 0
      %1229 = vmatprep.mubr.bf16.mxu0 0
      %1230 = vmatmul.mubr.bf16.gmra.mrb[0].mxu0 %v1144
      %v1231 = vpop.f32.mrb[0].mxu0
      %v1232 = vadd.f32 %v1031, %v1231
      %v1233 = vpop.f32.mrb[0].mxu0
      %v1234 = vpop.f32.mrb[0].mxu0
      %v1235 = vpop.f32.mrb[0].mxu0
      %1236 = vdwg.mxu0
      %v1239 = vcombine.low %v1191, %v1193
      %1241 = vst [vmem:[%s170] sm:$0xff] %v1239
      %1242 = vst [vmem:[%s170 + $0x8] sm:$0xf] %v1232
      %p1243 = scmp.lt.s32.totalorder %s14, 1
      %s1244 = scalar_select %p1243, %s14, 1
      %s1245 = smul.addr %s1244, 3
      %s1246 = smul.addr %s1245, 4
      %s1247 = scalar_lea.vmem %s3, %s1246
      // Predicated region
      $region33: #{forward.1} parent=31 // pred_check
        %p1248 = pneg %p100
      $region34: #{forward.1} parent=31 // pred_check_branch
        %1250 = sbr.rel (%p1248) target = $region36
      $region35: #{forward.1} parent=31 // pred_region
        _
      $region36: #{forward.1} parent=31 // pred_fallthru
        _
    $region32: #{forward.1} parent=5 // pred_fallthru
      _
    %p1251 = scmp.le.s32.totalorder 2, %s9
    // Predicated region
    $region37: #{forward.1} parent=5 // pred_check
      %p1252 = pneg %p1251
    $region38: #{forward.1} parent=5 // pred_check_branch
      %1254 = sbr.rel (%p1252) target = $region40
    $region39: #{forward.1} parent=5 // pred_region
      %s1255 = ssub.s32 %s9, 2
      // Predicated region
      $region41: #{forward.1} parent=39 // pred_check
        %p1256 = pneg %p106
      $region42: #{forward.1} parent=39 // pred_check_branch
        %1258 = sbr.rel (%p1256) target = $region44
      $region43: #{forward.1} parent=39 // pred_region
        %p1259 = scmp.lt.s32.totalorder %s15, 1
        %s1260 = scalar_select %p1259, %s15, 1
        %s1261 = smul.addr %s1260, 3
        %s1262 = smul.addr %s1261, 4
        %s1263 = scalar_lea.vmem %s3, %s1262
      $region44: #{forward.1} parent=39 // pred_fallthru
        _
    $region40: #{forward.1} parent=5 // pred_fallthru
      _
  $region6: #{forward.1} parent=0 // loop_footer
    %s13 = sadd.s32 1, %s9
  $region7: #{forward.1} parent=0 // loop_footer_branch
    %8 = sbr.rel target = $region3
  $region8: #{forward.1} parent=0 // loop_exit
    _

</llo_original>
